<compile_context>
chip_gen: v7x
topology: tpu7x:2x2x1
jax: 0.10.0
libtpu: 0.0.40
codegen_flags: <defaults>
</compile_context>

<pallas_src>
import functools
import math
from itertools import product

import numpy as np
import jax
import jax.numpy as jnp
from jax.experimental import pallas as pl
from jax.experimental.pallas import tpu as pltpu

# Sentinel for padded sample columns: (sentinel * inv_s)^2 >> 88 so the f32
# exp underflows to exactly 0 and padded samples never reach the Gram.
_PAD_SENTINEL = 1.0e3


# ----------------------------- Pallas kernel ------------------------------ #

def _ergodicity_kernel(x_ref, c_ref, coeffs_ref, acc_ref, *, k_max, inv_norm):
    """Gaussian-basis Fourier coefficients for Bt batches, one sample chunk.

    Grid: (batch_blocks [parallel], sample_chunks [arbitrary, reduction]).

    x_ref:      [Bt, 2, Nt]    Bt batches, Nt samples of this chunk
    c_ref:      [3, 2K, 1]     precomputed constants:
                               row 0: m0[r] = inv_s if r <  K else 0
                               row 1: m1[r] = inv_s if r >= K else 0
                               row 2: scaled centers c[r mod K] * inv_s
                               with inv_s = 1 / (sqrt(2) * sigma)
    coeffs_ref: [Bt, K, K]     agent coefficients for these batches (output)
    acc_ref:    [Bt, K, K]     VMEM f32 accumulator across sample chunks
    """
    j = pl.program_id(1)

    @pl.when(j == 0)
    def _():
        acc_ref[...] = jnp.zeros_like(acc_ref)

    m0 = c_ref[0]                    # [2K, 1]
    m1 = c_ref[1]                    # [2K, 1]
    cc = c_ref[2]                    # [2K, 1]

    x = x_ref[...]                   # [Bt, 2, Nt]
    x0 = x[:, 0:1, :]                # [Bt, 1, Nt]
    x1 = x[:, 1:2, :]                # [Bt, 1, Nt]

    # Stacked, pre-scaled differences: rows 0..K-1 are (x0 - c_i)*inv_s,
    # rows K..2K-1 are (x1 - c_j)*inv_s.  One exp over the whole stack.
    d = x0 * m0 + x1 * m1 - cc       # [Bt, 2K, Nt]
    g = jnp.exp(-(d * d))            # [Bt, 2K, Nt]   (EUP-bound)

    # Batched Gram over the sample axis; the cross block [0:K, K:2K] is
    # coeffs[b,i,j] * (A*T).  MXU is massively under-utilized but free here.
    gram = jnp.einsum('brn,bsn->brs', g, g,
                      preferred_element_type=jnp.float32)     # [Bt, 2K, 2K]
    acc_ref[...] += gram[:, :k_max, k_max:]

    @pl.when(j == pl.num_programs(1) - 1)
    def _():
        coeffs_ref[...] = acc_ref[...] * inv_norm


# ------------------------------ JAX wrapper -------------------------------- #

def density_coeffs_uniform(k_max, L):
    """coeffs_density for density='uniform' (real part of char. function)."""
    rho = np.ones((k_max,) * len(L), dtype=np.float32)
    for sets in product(range(k_max), repeat=len(L)):
        coeff = np.complex64(1.0)
        for i, Li in enumerate(L):
            ki = sets[i]
            if ki != 0:
                integral = (np.exp(1j * ki * Li) - 1.0) / (1j * ki)
            else:
                integral = Li
            coeff = coeff * np.complex64(integral / Li)
        rho[sets] = np.float32(coeff.real)
    return jnp.asarray(rho)


def make_ergodicity_loss(n_agents, n_timesteps, *, in_dim=2, k_max=10,
                         control_energy_reg=0.001, L=None, batch_tile=8,
                         sample_tile=2048):
    assert in_dim == 2, "varphi in the reference module only supports in_dim==2"
    assert k_max > 1, "centers use 1/(k_max-1)"
    if L is None:
        L = [1.0] * in_dim
    eps = 0.05
    sigma = max((math.sqrt(-2.0 * math.log(eps)) * (k_max - 1) * 2) ** (-1), 0.05)
    rho = density_coeffs_uniform(k_max, L)            # [K, K]

    # Host-side constants: selection masks (with the 1/(sqrt(2)*sigma) scale
    # folded in) and scaled cell centers, packed as [3, 2K, 1].
    inv_s = 1.0 / (math.sqrt(2.0) * sigma)
    idx = np.arange(2 * k_max)
    m0 = np.where(idx < k_max, inv_s, 0.0).astype(np.float32)
    m1 = (np.float32(inv_s) - m0).astype(np.float32)
    centers = np.arange(k_max, dtype=np.float32) / np.float32(k_max - 1)
    c2s = (np.tile(centers, 2) * np.float32(inv_s)).astype(np.float32)
    consts = jnp.asarray(np.stack([m0, m1, c2s], axis=0)[:, :, None])  # [3,2K,1]

    kernel = functools.partial(_ergodicity_kernel, k_max=k_max,
                               inv_norm=1.0 / (n_agents * n_timesteps))

    def loss_fn(x, u=None):
        # x: [n_timesteps, Batch, N_Agents, in_dim]  (same as PyTorch)
        T, B, A, D = x.shape
        assert T == n_timesteps and A == n_agents and D == in_dim
        N = T * A
        # -> [Batch, in_dim, T*A]  (samples on lanes, the 2 coords on sublanes)
        xt = jnp.transpose(x.astype(jnp.float32), (1, 3, 0, 2)).reshape(B, D, N)

        # Batch tiling (parallel axis): pad B up to a multiple of Bt.
        bt = min(batch_tile, B)
        n_blocks = -(-B // bt)
        b_pad = n_blocks * bt

        # Sample-chunk tiling (reduction axis): only chunk when N is large.
        if N <= sample_tile:
            tn, n_chunks, n_pad = N, 1, N
        else:
            tn = sample_tile                      # multiple of 128 (lane-aligned)
            n_chunks = -(-N // tn)
            n_pad = n_chunks * tn

        if b_pad != B or n_pad != N:
            # Sentinel padding -> exp() == 0 -> no contribution to the Gram.
            xt = jnp.pad(xt, ((0, b_pad - B), (0, 0), (0, n_pad - N)),
                         constant_values=_PAD_SENTINEL)

        grid_spec = pltpu.PrefetchScalarGridSpec(
            num_scalar_prefetch=0,
            grid=(n_blocks, n_chunks),
            in_specs=[
                pl.BlockSpec((bt, D, tn), lambda i, j: (i, 0, j)),
                pl.BlockSpec((3, 2 * k_max, 1), lambda i, j: (0, 0, 0)),
            ],
            out_specs=pl.BlockSpec((bt, k_max, k_max), lambda i, j: (i, 0, 0)),
            scratch_shapes=[pltpu.VMEM((bt, k_max, k_max), jnp.float32)],
        )
        coeffs = pl.pallas_call(
            kernel,
            grid_spec=grid_spec,
            out_shape=jax.ShapeDtypeStruct((b_pad, k_max, k_max), jnp.float32),
            compiler_params=pltpu.CompilerParams(
                dimension_semantics=("parallel", "arbitrary")),
        )(xt, consts)
        coeffs = coeffs[:B]

        # Tiny (B*K^2) loss reduction in plain JAX (norm_weights_scaled == 1).
        s = (coeffs - rho) * (1.0 / sigma)
        k2 = float(k_max * k_max)
        # term1 = mean_{b,j}[ sum_i s^2 / K^2 ]; term2 = mean_b[ sum_ij |s| / K^2 ]
        term1 = jnp.sum(s * s) / (B * k_max * k2)
        term2 = jnp.sum(jnp.abs(s)) / (B * k2)
        loss = (term1 + term2) * 0.5

        if u is not None:
            loss = loss + control_energy_reg * 100.0 * jnp.mean(jnp.abs(u[:5]) ** 2)
            loss = loss + control_energy_reg * jnp.mean(jnp.abs(u[5:]) ** 2) / 2.0
        return loss, coeffs

    return loss_fn, sigma, rho


# --------------------------- pure-JAX reference ---------------------------- #

def reference_loss(x, rho, sigma, k_max, n_agents, n_timesteps):
    T, B, A, D = x.shape
    ci = jnp.arange(k_max, dtype=jnp.float32) / (k_max - 1)
    c_grid = jnp.stack(jnp.meshgrid(ci, ci, indexing="ij"), axis=-1)       # [K,K,2]
    diff = x[:, :, :, None, None, :] - c_grid[None, None, None, :, :, :]   # [T,B,A,K,K,2]
    phi = jnp.exp(-jnp.sum(diff ** 2, axis=-1) / (2.0 * sigma ** 2))       # [T,B,A,K,K]
    coeffs = phi.sum(axis=0).sum(axis=1) / (n_agents * n_timesteps)        # [B,K,K]
    s = (coeffs - rho) / sigma
    k2 = k_max * k_max
    term1 = jnp.mean(jnp.sum(s ** 2, axis=1) / k2)
    term2 = jnp.mean(jnp.sum(jnp.abs(s), axis=(1, 2)) / k2)
    return (term1 + term2) / 2.0, coeffs


# ---------------------------------- main ----------------------------------- #

if __name__ == "__main__":
    N_AGENTS = 4
    N_TIMESTEPS = 8
    BATCH = 2
    IN_DIM = 2
    K_MAX = 10

    key = jax.random.PRNGKey(0)
    x = jax.random.uniform(key, (N_TIMESTEPS, BATCH, N_AGENTS, IN_DIM),
                           dtype=jnp.float32)   # agents live in [0, 1]^2

    loss_fn, sigma, rho = make_ergodicity_loss(N_AGENTS, N_TIMESTEPS,
                                               in_dim=IN_DIM, k_max=K_MAX)

    loss, coeffs = loss_fn(x, u=None)
    loss = jax.block_until_ready(loss)
    coeffs = jax.block_until_ready(coeffs)

    ref_loss, ref_coeffs = reference_loss(x, rho, sigma, K_MAX,
                                          N_AGENTS, N_TIMESTEPS)
    ref_loss = jax.block_until_ready(ref_loss)

    np.testing.assert_allclose(np.asarray(coeffs), np.asarray(ref_coeffs),
                               rtol=1e-3, atol=1e-5)
    np.testing.assert_allclose(float(loss), float(ref_loss),
                               rtol=1e-3, atol=1e-4)

    print("KERNEL_OK")
</pallas_src>

<mosaic_0001>
module attributes {stable_mosaic.version = 11 : i64} {
  func.func @_ergodicity_kernel(%arg0: i32, %arg1: i32, %arg2: memref<2x2x32xf32, #tpu.memory_space<vmem>>, %arg3: memref<3x20x1xf32, #tpu.memory_space<vmem>>, %arg4: memref<2x10x10xf32, #tpu.memory_space<vmem>>, %arg5: memref<2x10x10xf32, #tpu.memory_space<vmem>>) attributes {dimension_semantics = [#tpu.dimension_semantics<parallel>, #tpu.dimension_semantics<arbitrary>], iteration_bounds = array<i64: 1, 1>, scalar_prefetch = 0 : i64, scratch_operands = 1 : i64, tpu.core_type = #tpu.core_type<tc>, window_params = [{transform_indices = @transform_0, window_bounds = array<i64: 2, 2, 32>}, {pipeline_mode = #tpu.pipeline_mode<synchronous>, transform_indices = @transform_1, window_bounds = array<i64: 3, 20, 1>}, {transform_indices = @transform_2, window_bounds = array<i64: 2, 10, 10>}]} {
    %c0_i32 = arith.constant 0 : i32
    %0 = arith.cmpi eq, %arg1, %c0_i32 : i32
    %1 = arith.extui %0 : i1 to i32
    %c0_i32_0 = arith.constant 0 : i32
    %2 = arith.cmpi ne, %1, %c0_i32_0 : i32
    scf.if %2 {
      %cst_19 = arith.constant 0.000000e+00 : f32
      %36 = vector.broadcast %cst_19 : f32 to vector<2x10x10xf32>
      %c0_20 = arith.constant 0 : index
      %c0_21 = arith.constant 0 : index
      %c0_22 = arith.constant 0 : index
      %37 = vector.load %arg5[%c0_20, %c0_21, %c0_22] : memref<2x10x10xf32, #tpu.memory_space<vmem>>, vector<2x10x10xf32>
      tpu.vector_store %arg5[%c0_20, %c0_21, %c0_22], %36 {strides = array<i32>} : memref<2x10x10xf32, #tpu.memory_space<vmem>>, vector<2x10x10xf32>,
    } else {
    }
    %c0 = arith.constant 0 : index
    %c0_1 = arith.constant 0 : index
    %c0_2 = arith.constant 0 : index
    %3 = vector.load %arg3[%c0, %c0_1, %c0_2] : memref<3x20x1xf32, #tpu.memory_space<vmem>>, vector<1x20x1xf32>
    %4 = vector.shape_cast %3 : vector<1x20x1xf32> to vector<20x1xf32>
    %c1 = arith.constant 1 : index
    %c0_3 = arith.constant 0 : index
    %c0_4 = arith.constant 0 : index
    %5 = vector.load %arg3[%c1, %c0_3, %c0_4] : memref<3x20x1xf32, #tpu.memory_space<vmem>>, vector<1x20x1xf32>
    %6 = vector.shape_cast %5 : vector<1x20x1xf32> to vector<20x1xf32>
    %c2 = arith.constant 2 : index
    %c0_5 = arith.constant 0 : index
    %c0_6 = arith.constant 0 : index
    %7 = vector.load %arg3[%c2, %c0_5, %c0_6] : memref<3x20x1xf32, #tpu.memory_space<vmem>>, vector<1x20x1xf32>
    %8 = vector.shape_cast %7 : vector<1x20x1xf32> to vector<20x1xf32>
    %c0_7 = arith.constant 0 : index
    %c0_8 = arith.constant 0 : index
    %c0_9 = arith.constant 0 : index
    %9 = vector.load %arg2[%c0_7, %c0_8, %c0_9] : memref<2x2x32xf32, #tpu.memory_space<vmem>>, vector<2x2x32xf32>
    %10 = vector.extract_strided_slice %9 {offsets = [0, 0, 0], sizes = [2, 1, 32], strides = [1, 1, 1]} : vector<2x2x32xf32> to vector<2x1x32xf32>
    %11 = vector.extract_strided_slice %9 {offsets = [0, 1, 0], sizes = [2, 1, 32], strides = [1, 1, 1]} : vector<2x2x32xf32> to vector<2x1x32xf32>
    %12 = vector.shape_cast %4 : vector<20x1xf32> to vector<1x20x1xf32>
    %13 = vector.broadcast %10 : vector<2x1x32xf32> to vector<2x20x32xf32>
    %14 = vector.broadcast %12 : vector<1x20x1xf32> to vector<2x20x32xf32>
    %15 = arith.mulf %13, %14 : vector<2x20x32xf32>
    %16 = vector.shape_cast %6 : vector<20x1xf32> to vector<1x20x1xf32>
    %17 = vector.broadcast %11 : vector<2x1x32xf32> to vector<2x20x32xf32>
    %18 = vector.broadcast %16 : vector<1x20x1xf32> to vector<2x20x32xf32>
    %19 = arith.mulf %17, %18 : vector<2x20x32xf32>
    %20 = arith.addf %15, %19 : vector<2x20x32xf32>
    %21 = vector.shape_cast %8 : vector<20x1xf32> to vector<1x20x1xf32>
    %22 = vector.broadcast %21 : vector<1x20x1xf32> to vector<2x20x32xf32>
    %23 = arith.subf %20, %22 : vector<2x20x32xf32>
    %24 = arith.mulf %23, %23 : vector<2x20x32xf32>
    %cst = arith.constant 0.000000e+00 : f32
    %25 = vector.broadcast %cst : f32 to vector<2x20x32xf32>
    %26 = arith.subf %25, %24 : vector<2x20x32xf32>
    %27 = math.exp %26 : vector<2x20x32xf32>
    "tpu.trace_start"() <{level = 10 : i32, message = "brn,bsn->brs"}> : () -> ()
    %cst_10 = arith.constant dense<0.000000e+00> : vector<2x20x20xf32>
    %28 = tpu.matmul %27, %27, %cst_10 {dimension_numbers = #tpu.dot_dimension_numbers<[2], [2], [1], [1], [0, 0, 0, 1, 1, 1], [0], [0]>} : vector<2x20x32xf32>, vector<2x20x32xf32>, vector<2x20x20xf32> -> vector<2x20x20xf32>
    "tpu.trace_stop"() : () -> ()
    %c0_11 = arith.constant 0 : index
    %c0_12 = arith.constant 0 : index
    %c0_13 = arith.constant 0 : index
    %29 = vector.load %arg5[%c0_11, %c0_12, %c0_13] : memref<2x10x10xf32, #tpu.memory_space<vmem>>, vector<2x10x10xf32>
    %30 = vector.extract_strided_slice %28 {offsets = [0, 0, 10], sizes = [2, 10, 10], strides = [1, 1, 1]} : vector<2x20x20xf32> to vector<2x10x10xf32>
    %31 = arith.addf %29, %30 : vector<2x10x10xf32>
    %c0_14 = arith.constant 0 : index
    %c0_15 = arith.constant 0 : index
    %c0_16 = arith.constant 0 : index
    %32 = vector.load %arg5[%c0_14, %c0_15, %c0_16] : memref<2x10x10xf32, #tpu.memory_space<vmem>>, vector<2x10x10xf32>
    tpu.vector_store %arg5[%c0_14, %c0_15, %c0_16], %31 {strides = array<i32>} : memref<2x10x10xf32, #tpu.memory_space<vmem>>, vector<2x10x10xf32>,
    %c0_i32_17 = arith.constant 0 : i32
    %33 = arith.cmpi eq, %arg1, %c0_i32_17 : i32
    %34 = arith.extui %33 : i1 to i32
    %c0_i32_18 = arith.constant 0 : i32
    %35 = arith.cmpi ne, %34, %c0_i32_18 : i32
    scf.if %35 {
      %c0_19 = arith.constant 0 : index
      %c0_20 = arith.constant 0 : index
      %c0_21 = arith.constant 0 : index
      %36 = vector.load %arg5[%c0_19, %c0_20, %c0_21] : memref<2x10x10xf32, #tpu.memory_space<vmem>>, vector<2x10x10xf32>
      %cst_22 = arith.constant 3.125000e-02 : f32
      %37 = vector.broadcast %cst_22 : f32 to vector<2x10x10xf32>
      %38 = arith.mulf %36, %37 : vector<2x10x10xf32>
      %c0_23 = arith.constant 0 : index
      %c0_24 = arith.constant 0 : index
      %c0_25 = arith.constant 0 : index
      %39 = vector.load %arg4[%c0_23, %c0_24, %c0_25] : memref<2x10x10xf32, #tpu.memory_space<vmem>>, vector<2x10x10xf32>
      tpu.vector_store %arg4[%c0_23, %c0_24, %c0_25], %38 {strides = array<i32>} : memref<2x10x10xf32, #tpu.memory_space<vmem>>, vector<2x10x10xf32>,
    } else {
    }
    return
  }
  func.func @transform_0(%arg0: i32, %arg1: i32) -> (i32, i32, i32) {
    %c0_i32 = arith.constant 0 : i32
    %c0_i32_0 = arith.constant 0 : i32
    return %arg0, %c0_i32, %arg1 : i32, i32, i32
  }
  func.func @transform_1(%arg0: i32, %arg1: i32) -> (i32, i32, i32) {
    %c0_i32 = arith.constant 0 : i32
    %c0_i32_0 = arith.constant 0 : i32
    %c0_i32_1 = arith.constant 0 : i32
    %c0_i32_2 = arith.constant 0 : i32
    return %c0_i32, %c0_i32_0, %c0_i32_1 : i32, i32, i32
  }
  func.func @transform_2(%arg0: i32, %arg1: i32) -> (i32, i32, i32) {
    %c0_i32 = arith.constant 0 : i32
    %c0_i32_0 = arith.constant 0 : i32
    %c0_i32_1 = arith.constant 0 : i32
    return %arg0, %c0_i32, %c0_i32_0 : i32, i32, i32
  }
}

</mosaic_0001>

<llo_original>
// kernel: tpu_custom_call.1
$region0: #{tpu_custom_call.1}
  #allocation0 [shape = 'u32[]', space=smem, size = 0x4, offset = 0x4, fixed_abs, tag = 'smem constant byte address 0x4 - core index']
  #allocation1 [shape = 'u32[144,128]{1,0:T(1,128)}', space=vmem, size = 0x12000, scoped, tag = 'internal scratch']
  #allocation2 [shape = 'f32[2,10,10]{2,1,0:T(8,128)}', space=vmem, size = 0x4000, scoped, tag = 'scratch operand']
  %s0 = inlined_call_operand.vmem [shape: f32[2,2,32], index: 0, kind: input, shape index: {}]
  %s1 = inlined_call_operand.vmem [shape: f32[3,20,1], index: 1, kind: input, shape index: {}]
  %s2 = inlined_call_operand.vmem [shape: f32[2,10,10], index: 2, kind: output, shape index: {}]
  %s3 = sld [smem:[#allocation0]]
  $region26: #{tpu_custom_call.1} parent=0
    _
  %s5 = ssub.s32 1, %s3
  %s6 = scalar_select 0, %s5, %s3
  // Predicated region
  $region2: #{tpu_custom_call.1} parent=0 // pred_check
    _
  $region3: #{tpu_custom_call.1} parent=0 // pred_check_branch
    %8 = sbr.rel (0) target = $region5
  $region4: #{tpu_custom_call.1} parent=0 // pred_region
    _
  $region5: #{tpu_custom_call.1} parent=0 // pred_fallthru
    _
  // Predicated region
  $region6: #{tpu_custom_call.1} parent=0 // pred_check
    _
  $region7: #{tpu_custom_call.1} parent=0 // pred_check_branch
    %10 = sbr.rel (0) target = $region9
  $region8: #{tpu_custom_call.1} parent=0 // pred_region
    _
  $region9: #{tpu_custom_call.1} parent=0 // pred_fallthru
    _
  %p11 = scmp.eq.s32.totalorder 0, 0
  // Predicated region
  $region10: #{tpu_custom_call.1} parent=0 // pred_check
    %p12 = pneg %p11
  $region11: #{tpu_custom_call.1} parent=0 // pred_check_branch
    %14 = sbr.rel (%p12) target = $region13
  $region12: #{tpu_custom_call.1} parent=0 // pred_region
    %vm15 = vcmask 80896
    %16 = vst.msk [vmem:[#allocation2] sm:$0xff] %vm15, 0.0
    %vm17 = vcmask 74752
    %18 = vst.msk [vmem:[#allocation2 + $0x8] sm:$0x3] %vm17, 0.0
    %19 = vst.msk [vmem:[#allocation2 + $0x10] sm:$0xff] %vm15, 0.0
    %20 = vst.msk [vmem:[#allocation2 + $0x18] sm:$0x3] %vm17, 0.0
  $region13: #{tpu_custom_call.1} parent=0 // pred_fallthru
    _
  %v21 = vld [vmem:[%s1] sm:$0xff]
  %v22 = vld [vmem:[%s1 + $0x8] sm:$0xff]
  %v23 = vld [vmem:[%s1 + $0x10] sm:$0xf]
  %s24 = scalar_lea.vmem %s1, 24
  %v25 = vld [vmem:[%s24] sm:$0xff]
  %v26 = vld [vmem:[%s24 + $0x8] sm:$0xff]
  %v27 = vld [vmem:[%s24 + $0x10] sm:$0xf]
  %s28 = scalar_lea.vmem %s1, 48
  %v29 = vld [vmem:[%s28] sm:$0xff]
  %v30 = vld [vmem:[%s28 + $0x8] sm:$0xff]
  %v31 = vld [vmem:[%s28 + $0x10] sm:$0xf]
  %v32 = vld [vmem:[%s0] sm:$0x3]
  %v33 = vld [vmem:[%s0 + $0x2] sm:$0x3]
  %v34 = vlaneseq
  %v35 = vshrl.u32 %v34, 7
  %v36 = vsub.s32 0, %v35
  %v37 = vrot.slane %v32, %v36
  %v38 = vlaneseq
  %v39 = vshrl.u32 %v38, 7
  %v40 = vsub.s32 0, %v39
  %v41 = vrot.slane %v33, %v40
  %43 = vset.pattern.permute.xlu0 0
  %44 = vperm.xlu0 %43, %v21
  %v45 = vpop.permute.xlu0 %44
  %48 = vset.pattern.permute.xlu0 0
  %49 = vperm.xlu0 %48, %v22
  %v50 = vpop.permute.xlu0 %49
  %53 = vset.pattern.permute.xlu0 0
  %54 = vperm.xlu0 %53, %v23
  %v55 = vpop.permute.xlu0 %54
  %v57 = vmul.f32 %v37, %v45
  %v58 = vmul.f32 %v37, %v50
  %v59 = vmul.f32 %v37, %v55
  %v60 = vmul.f32 %v41, %v45
  %v61 = vmul.f32 %v41, %v50
  %v62 = vmul.f32 %v41, %v55
  %v63 = vlaneseq
  %v64 = vshrl.u32 %v63, 7
  %v65 = vsub.s32 1, %v64
  %v66 = vrot.slane %v32, %v65
  %v67 = vlaneseq
  %v68 = vshrl.u32 %v67, 7
  %v69 = vsub.s32 1, %v68
  %v70 = vrot.slane %v33, %v69
  %72 = vset.pattern.permute.xlu0 0
  %73 = vperm.xlu0 %72, %v25
  %v74 = vpop.permute.xlu0 %73
  %77 = vset.pattern.permute.xlu0 0
  %78 = vperm.xlu0 %77, %v26
  %v79 = vpop.permute.xlu0 %78
  %82 = vset.pattern.permute.xlu0 0
  %83 = vperm.xlu0 %82, %v27
  %v84 = vpop.permute.xlu0 %83
  %v86 = vmul.f32 %v66, %v74
  %v87 = vmul.f32 %v66, %v79
  %v88 = vmul.f32 %v66, %v84
  %v89 = vmul.f32 %v70, %v74
  %v90 = vmul.f32 %v70, %v79
  %v91 = vmul.f32 %v70, %v84
  %v92 = vadd.f32 %v57, %v86
  %v93 = vadd.f32 %v58, %v87
  %v94 = vadd.f32 %v59, %v88
  %v95 = vadd.f32 %v60, %v89
  %v96 = vadd.f32 %v61, %v90
  %v97 = vadd.f32 %v62, %v91
  %99 = vset.pattern.permute.xlu0 0
  %100 = vperm.xlu0 %99, %v29
  %v101 = vpop.permute.xlu0 %100
  %104 = vset.pattern.permute.xlu0 0
  %105 = vperm.xlu0 %104, %v30
  %v106 = vpop.permute.xlu0 %105
  %109 = vset.pattern.permute.xlu0 0
  %110 = vperm.xlu0 %109, %v31
  %v111 = vpop.permute.xlu0 %110
  %v113 = vsub.f32 %v92, %v101
  %v114 = vsub.f32 %v93, %v106
  %v115 = vsub.f32 %v94, %v111
  %v116 = vsub.f32 %v95, %v101
  %v117 = vsub.f32 %v96, %v106
  %v118 = vsub.f32 %v97, %v111
  %v119 = vmul.f32 %v113, %v113
  %v120 = vmul.f32 %v114, %v114
  %v121 = vmul.f32 %v115, %v115
  %v122 = vmul.f32 %v116, %v116
  %v123 = vmul.f32 %v117, %v117
  %v124 = vmul.f32 %v118, %v118
  %v125 = vsub.f32 0.0, %v119
  %v126 = vsub.f32 0.0, %v120
  %v127 = vsub.f32 0.0, %v121
  %v128 = vsub.f32 0.0, %v122
  %v129 = vsub.f32 0.0, %v123
  %v130 = vsub.f32 0.0, %v124
  %v131 = vmul.f32 %v125, 1.442695
  %v132 = vpow.pop %v131
  %v133 = vmul.f32 %v126, 1.442695
  %v134 = vpow.pop %v133
  %v135 = vmul.f32 %v127, 1.442695
  %v136 = vpow.pop %v135
  %v137 = vmul.f32 %v128, 1.442695
  %v138 = vpow.pop %v137
  %v139 = vmul.f32 %v129, 1.442695
  %v140 = vpow.pop %v139
  %v141 = vmul.f32 %v130, 1.442695
  %v142 = vpow.pop %v141
  %vm143 = vcmask 261120
  %v145 = vsel %vm143, %v132, 0
  %v148 = vsel %vm143, %v134, 0
  %v151 = vsel %vm143, %v136, 0
  %153 = vmatprep.subr.mxu0 0.0
  %154 = vmatpush1.xpose.msra.mxu0 %v145
  %155 = vmatprep.subr.mxu0 0.0
  %156 = vmatpush1.xpose.msra.mxu0 %v148
  %157 = vmatprep.subr.mxu0 0.0
  %158 = vmatpush1.xpose.msra.mxu0 %v151
  %159 = vmatprep.subr.mxu0 0.0
  %160 = vmatpush1.xpose.msra.mxu0 0.0
  %161 = vmatprep.subr.mxu0 0.0
  %162 = vmatpush1.xpose.msra.mxu0 0.0
  %163 = vmatprep.subr.mxu0 0.0
  %164 = vmatpush1.xpose.msra.mxu0 0.0
  %165 = vmatprep.subr.mxu0 0.0
  %166 = vmatpush1.xpose.msra.mxu0 0.0
  %167 = vmatprep.subr.mxu0 0.0
  %168 = vmatpush1.xpose.msra.mxu0 0.0
  %169 = vmatprep.subr.mxu0 0.0
  %170 = vmatpush1.xpose.msra.mxu0 0.0
  %171 = vmatprep.subr.mxu0 0.0
  %172 = vmatpush1.xpose.msra.mxu0 0.0
  %173 = vmatprep.subr.mxu0 0.0
  %174 = vmatpush1.xpose.msra.mxu0 0.0
  %175 = vmatprep.subr.mxu0 0.0
  %176 = vmatpush1.xpose.msra.mxu0 0.0
  %177 = vmatprep.subr.mxu0 0.0
  %178 = vmatpush1.xpose.msra.mxu0 0.0
  %179 = vmatprep.subr.mxu0 0.0
  %180 = vmatpush1.xpose.msra.mxu0 0.0
  %181 = vmatprep.subr.mxu0 0.0
  %182 = vmatpush1.xpose.msra.mxu0 0.0
  %183 = vmatprep.subr.mxu0 0.0
  %184 = vmatpush1.xpose.msra.mxu0 0.0
  %185 = vmatprep.subr.mxu0 0.0
  %186 = vmatpush1.xpose.msra.mxu0 0.0
  %187 = vmatprep.subr.mxu0 0.0
  %188 = vmatpush1.xpose.msra.mxu0 0.0
  %189 = vmatprep.subr.mxu0 0.0
  %190 = vmatpush1.xpose.msra.mxu0 0.0
  %191 = vmatprep.subr.mxu0 0.0
  %192 = vmatpush1.xpose.msra.mxu0 0.0
  %193 = vmatprep.subr.mxu0 0.0
  %194 = vmatpush1.xpose.msra.mxu0 0.0
  %195 = vmatprep.subr.mxu0 0.0
  %196 = vmatpush1.xpose.msra.mxu0 0.0
  %197 = vmatprep.subr.mxu0 0.0
  %198 = vmatpush1.xpose.msra.mxu0 0.0
  %199 = vmatprep.subr.mxu0 0.0
  %200 = vmatpush1.xpose.msra.mxu0 0.0
  %201 = vmatprep.subr.mxu0 0.0
  %202 = vmatpush1.xpose.msra.mxu0 0.0
  %203 = vmatprep.subr.mxu0 0.0
  %204 = vmatpush1.xpose.msra.mxu0 0.0
  %205 = vmatprep.subr.mxu0 0.0
  %206 = vmatpush1.xpose.msra.mxu0 0.0
  %207 = vmatprep.subr.mxu0 0.0
  %208 = vmatpush1.xpose.msra.mxu0 0.0
  %209 = vmatprep.subr.mxu0 0.0
  %210 = vmatpush1.xpose.msra.mxu0 0.0
  %211 = vmatprep.subr.mxu0 0.0
  %212 = vmatpush1.xpose.msra.mxu0 0.0
  %213 = vmatprep.subr.mxu0 0.0
  %214 = vmatpush1.xpose.msra.mxu0 0.0
  %215 = vmatprep.subr.mxu0 0.0
  %216 = vmatpush1.xpose.msra.mxu0 0.0
  %217 = vmatprep.mubr.f32.mxu0 0.0
  %218 = vmatmul.mubr.f32.gmra.mrb[0].mxu0 %v145
  %v219 = vpop.f32.mrb[0].mxu0
  %v220 = vadd.f32 0.0, %v219
  %v221 = vpop.f32.mrb[0].mxu0
  %222 = vmatprep.mubr.f32.mxu0 0.0
  %223 = vmatmul.mubr.f32.gmra.mrb[0].mxu0 %v148
  %v224 = vpop.f32.mrb[0].mxu0
  %v225 = vadd.f32 0.0, %v224
  %v226 = vpop.f32.mrb[0].mxu0
  %227 = vmatprep.mubr.f32.mxu0 0.0
  %228 = vmatmul.mubr.f32.gmra.mrb[0].mxu0 %v151
  %v229 = vpop.f32.mrb[0].mxu0
  %v230 = vpop.f32.mrb[0].mxu0
  %231 = vdwg.mxu0
  %v233 = vsel %vm143, %v138, 0
  %v236 = vsel %vm143, %v140, 0
  %v239 = vsel %vm143, %v142, 0
  %241 = vmatprep.subr.mxu0 0.0
  %242 = vmatpush1.xpose.msra.mxu0 %v233
  %243 = vmatprep.subr.mxu0 0.0
  %244 = vmatpush1.xpose.msra.mxu0 %v236
  %245 = vmatprep.subr.mxu0 0.0
  %246 = vmatpush1.xpose.msra.mxu0 %v239
  %247 = vmatprep.subr.mxu0 0.0
  %248 = vmatpush1.xpose.msra.mxu0 0.0
  %249 = vmatprep.subr.mxu0 0.0
  %250 = vmatpush1.xpose.msra.mxu0 0.0
  %251 = vmatprep.subr.mxu0 0.0
  %252 = vmatpush1.xpose.msra.mxu0 0.0
  %253 = vmatprep.subr.mxu0 0.0
  %254 = vmatpush1.xpose.msra.mxu0 0.0
  %255 = vmatprep.subr.mxu0 0.0
  %256 = vmatpush1.xpose.msra.mxu0 0.0
  %257 = vmatprep.subr.mxu0 0.0
  %258 = vmatpush1.xpose.msra.mxu0 0.0
  %259 = vmatprep.subr.mxu0 0.0
  %260 = vmatpush1.xpose.msra.mxu0 0.0
  %261 = vmatprep.subr.mxu0 0.0
  %262 = vmatpush1.xpose.msra.mxu0 0.0
  %263 = vmatprep.subr.mxu0 0.0
  %264 = vmatpush1.xpose.msra.mxu0 0.0
  %265 = vmatprep.subr.mxu0 0.0
  %266 = vmatpush1.xpose.msra.mxu0 0.0
  %267 = vmatprep.subr.mxu0 0.0
  %268 = vmatpush1.xpose.msra.mxu0 0.0
  %269 = vmatprep.subr.mxu0 0.0
  %270 = vmatpush1.xpose.msra.mxu0 0.0
  %271 = vmatprep.subr.mxu0 0.0
  %272 = vmatpush1.xpose.msra.mxu0 0.0
  %273 = vmatprep.subr.mxu0 0.0
  %274 = vmatpush1.xpose.msra.mxu0 0.0
  %275 = vmatprep.subr.mxu0 0.0
  %276 = vmatpush1.xpose.msra.mxu0 0.0
  %277 = vmatprep.subr.mxu0 0.0
  %278 = vmatpush1.xpose.msra.mxu0 0.0
  %279 = vmatprep.subr.mxu0 0.0
  %280 = vmatpush1.xpose.msra.mxu0 0.0
  %281 = vmatprep.subr.mxu0 0.0
  %282 = vmatpush1.xpose.msra.mxu0 0.0
  %283 = vmatprep.subr.mxu0 0.0
  %284 = vmatpush1.xpose.msra.mxu0 0.0
  %285 = vmatprep.subr.mxu0 0.0
  %286 = vmatpush1.xpose.msra.mxu0 0.0
  %287 = vmatprep.subr.mxu0 0.0
  %288 = vmatpush1.xpose.msra.mxu0 0.0
  %289 = vmatprep.subr.mxu0 0.0
  %290 = vmatpush1.xpose.msra.mxu0 0.0
  %291 = vmatprep.subr.mxu0 0.0
  %292 = vmatpush1.xpose.msra.mxu0 0.0
  %293 = vmatprep.subr.mxu0 0.0
  %294 = vmatpush1.xpose.msra.mxu0 0.0
  %295 = vmatprep.subr.mxu0 0.0
  %296 = vmatpush1.xpose.msra.mxu0 0.0
  %297 = vmatprep.subr.mxu0 0.0
  %298 = vmatpush1.xpose.msra.mxu0 0.0
  %299 = vmatprep.subr.mxu0 0.0
  %300 = vmatpush1.xpose.msra.mxu0 0.0
  %301 = vmatprep.subr.mxu0 0.0
  %302 = vmatpush1.xpose.msra.mxu0 0.0
  %303 = vmatprep.subr.mxu0 0.0
  %304 = vmatpush1.xpose.msra.mxu0 0.0
  %305 = vmatprep.mubr.f32.mxu0 0.0
  %306 = vmatmul.mubr.f32.gmra.mrb[0].mxu0 %v233
  %v307 = vpop.f32.mrb[0].mxu0
  %v308 = vadd.f32 0.0, %v307
  %v309 = vpop.f32.mrb[0].mxu0
  %310 = vmatprep.mubr.f32.mxu0 0.0
  %311 = vmatmul.mubr.f32.gmra.mrb[0].mxu0 %v236
  %v312 = vpop.f32.mrb[0].mxu0
  %v313 = vadd.f32 0.0, %v312
  %v314 = vpop.f32.mrb[0].mxu0
  %315 = vmatprep.mubr.f32.mxu0 0.0
  %316 = vmatmul.mubr.f32.gmra.mrb[0].mxu0 %v239
  %v317 = vpop.f32.mrb[0].mxu0
  %v318 = vpop.f32.mrb[0].mxu0
  %319 = vdwg.mxu0
  %v320 = vld [vmem:[#allocation2] sm:$0xff]
  %v321 = vld [vmem:[#allocation2 + $0x8] sm:$0x3]
  %v322 = vld [vmem:[#allocation2 + $0x10] sm:$0xff]
  %v323 = vld [vmem:[#allocation2 + $0x18] sm:$0x3]
  %328 = vrot.lane.b32.xlu0 %v220, 118
  %v329 = vpop.permute.xlu0 %328
  %330 = vrot.lane.b32.xlu0 %v225, 118
  %v331 = vpop.permute.xlu0 %330
  %332 = vrot.lane.b32.xlu0 %v308, 118
  %v333 = vpop.permute.xlu0 %332
  %334 = vrot.lane.b32.xlu0 %v313, 118
  %v335 = vpop.permute.xlu0 %334
  %v340 = vadd.f32 %v320, %v329
  %v341 = vadd.f32 %v321, %v331
  %v342 = vadd.f32 %v322, %v333
  %v343 = vadd.f32 %v323, %v335
  %vm344 = vcmask 80896
  %345 = vst.msk [vmem:[#allocation2] sm:$0xff] %vm344, %v340
  %vm346 = vcmask 74752
  %347 = vst.msk [vmem:[#allocation2 + $0x8] sm:$0x3] %vm346, %v341
  %348 = vst.msk [vmem:[#allocation2 + $0x10] sm:$0xff] %vm344, %v342
  %349 = vst.msk [vmem:[#allocation2 + $0x18] sm:$0x3] %vm346, %v343
  // Predicated region
  $region14: #{tpu_custom_call.1} parent=0 // pred_check
    %p350 = pneg %p11
  $region15: #{tpu_custom_call.1} parent=0 // pred_check_branch
    %352 = sbr.rel (%p350) target = $region17
  $region16: #{tpu_custom_call.1} parent=0 // pred_region
    %v353 = vld [vmem:[#allocation2] sm:$0xff]
    %v354 = vld [vmem:[#allocation2 + $0x8] sm:$0x3]
    %v355 = vld [vmem:[#allocation2 + $0x10] sm:$0xff]
    %v356 = vld [vmem:[#allocation2 + $0x18] sm:$0x3]
    %v357 = vmul.f32 %v353, 0.03125
    %v358 = vmul.f32 %v354, 0.03125
    %v359 = vmul.f32 %v355, 0.03125
    %v360 = vmul.f32 %v356, 0.03125
    %361 = vst.msk [vmem:[%s2] sm:$0xff] %vm344, %v357
    %362 = vst.msk [vmem:[%s2 + $0x8] sm:$0x3] %vm346, %v358
    %363 = vst.msk [vmem:[%s2 + $0x10] sm:$0xff] %vm344, %v359
    %364 = vst.msk [vmem:[%s2 + $0x18] sm:$0x3] %vm346, %v360
  $region17: #{tpu_custom_call.1} parent=0 // pred_fallthru
    _
  // Predicated region
  $region18: #{tpu_custom_call.1} parent=0 // pred_check
    _
  $region19: #{tpu_custom_call.1} parent=0 // pred_check_branch
    %366 = sbr.rel (0) target = $region21
  $region20: #{tpu_custom_call.1} parent=0 // pred_region
    _
  $region21: #{tpu_custom_call.1} parent=0 // pred_fallthru
    _
  // Predicated region
  $region22: #{tpu_custom_call.1} parent=0 // pred_check
    _
  $region23: #{tpu_custom_call.1} parent=0 // pred_check_branch
    %368 = sbr.rel (0) target = $region25
  $region24: #{tpu_custom_call.1} parent=0 // pred_region
    _
  $region25: #{tpu_custom_call.1} parent=0 // pred_fallthru
    _

</llo_original>
